<compile_context>
chip_gen: v7x
topology: tpu7x:2x2x1
jax: 0.10.0
libtpu: 0.0.40
codegen_flags: <defaults>
</compile_context>

<pallas_src>
from functools import partial

import jax
import jax.numpy as jnp
from jax.experimental import pallas as pl
from jax.experimental.pallas import tpu as pltpu

_BN_EPS = 1e-5


def _round_up(x, m):
    return (x + m - 1) // m * m


def _pick_tile(total, cap):
    """Largest multiple of 128 that divides `total` (which is 128-aligned) and is <= cap."""
    cap = max(128, min(cap, total))
    for t in range(cap // 128, 0, -1):
        if total % (t * 128) == 0:
            return t * 128
    return 128


def _vmem_limit_bytes():
    """Generation-aware scoped-VMEM budget (v7x: ~48 MiB, v5e/v6e: 96 MiB)."""
    try:
        cap = int(pltpu.get_tpu_info().vmem_capacity_bytes)
        return min(cap * 3 // 4, 96 * 1024 * 1024)
    except Exception:
        return 48 * 1024 * 1024


# ----------------------- Kernel A: conv (matmul) + BN stats -------------------

def _conv_stats_kernel(x_ref, w_ref, y_ref, sum_ref, ssq_ref):
    # x_ref:   (K, TM) bf16 im2col tile (channel-major, lane dim = rows)
    # w_ref:   (C, K)  bf16 resident weight matrix
    # y_ref:   (C, TM) bf16 conv output tile (lane-dense store)
    # sum_ref: (C, 1)  f32 per-channel sum      (grid-resident per outer slice)
    # ssq_ref: (C, 1)  f32 per-channel sum(y^2) (grid-resident per outer slice)
    @pl.when(pl.program_id(1) == 0)
    def _init():
        sum_ref[...] = jnp.zeros_like(sum_ref)
        ssq_ref[...] = jnp.zeros_like(ssq_ref)

    y = jnp.dot(w_ref[...], x_ref[...], preferred_element_type=jnp.float32)
    sum_ref[...] += jnp.sum(y, axis=1, keepdims=True)
    ssq_ref[...] += jnp.sum(y * y, axis=1, keepdims=True)
    y_ref[...] = y.astype(y_ref.dtype)


def conv_stats(x_t, w_mat, *, tile_m=1024):
    """x_t: (K, M) channel-major im2col patches, w_mat: (C, K).

    Returns (y (C, m_pad) bf16, per-channel sum (C,) f32, per-channel sumsq (C,) f32).
    Padded columns are zero and contribute 0 to both sums.
    """
    K, M = x_t.shape
    C = w_mat.shape[0]
    if x_t.dtype != jnp.bfloat16:
        x_t = x_t.astype(jnp.bfloat16)
    if w_mat.dtype != jnp.bfloat16:
        w_mat = w_mat.astype(jnp.bfloat16)

    m_pad = _round_up(M, 128)
    if m_pad != M:
        x_t = jnp.pad(x_t, ((0, 0), (0, m_pad - M)))

    tm = _pick_tile(m_pad, tile_m)
    n_tiles = m_pad // tm
    n_par = 2 if (n_tiles >= 2 and n_tiles % 2 == 0) else 1   # v7x dual-TC split
    n_inner = n_tiles // n_par

    flops = 2 * m_pad * K * C
    bytes_accessed = (m_pad * K * 2 + K * C * 2 + m_pad * C * 2
                      + 2 * n_par * C * 4)

    y, s, ss = pl.pallas_call(
        _conv_stats_kernel,
        out_shape=(jax.ShapeDtypeStruct((C, m_pad), jnp.bfloat16),
                   jax.ShapeDtypeStruct((n_par, C, 1), jnp.float32),
                   jax.ShapeDtypeStruct((n_par, C, 1), jnp.float32)),
        grid=(n_par, n_inner),
        in_specs=[pl.BlockSpec((K, tm), lambda p, i: (0, p * n_inner + i)),
                  pl.BlockSpec((C, K), lambda p, i: (0, 0))],
        out_specs=(pl.BlockSpec((C, tm), lambda p, i: (0, p * n_inner + i)),
                   pl.BlockSpec((None, C, 1), lambda p, i: (p, 0, 0)),
                   pl.BlockSpec((None, C, 1), lambda p, i: (p, 0, 0))),
        compiler_params=pltpu.CompilerParams(
            dimension_semantics=("parallel", "arbitrary"),
            vmem_limit_bytes=_vmem_limit_bytes()),
        cost_estimate=pl.CostEstimate(flops=flops, transcendentals=0,
                                      bytes_accessed=bytes_accessed),
    )(x_t, w_mat)
    # combine per-core partial moments
    return y, jnp.sum(s, axis=0)[:, 0], jnp.sum(ss, axis=0)[:, 0]


# ------------------ Kernel B: BN affine (+residual) + ReLU --------------------

def _bn_apply_relu_kernel(y_ref, scale_ref, shift_ref, o_ref):
    y = y_ref[...].astype(jnp.float32)
    o_ref[...] = jnp.maximum(y * scale_ref[...] + shift_ref[...], 0.0).astype(o_ref.dtype)


def _bn_apply_add_relu_kernel(y_ref, scale_ref, shift_ref, sc_ref, o_ref):
    y = y_ref[...].astype(jnp.float32)
    sc = sc_ref[...].astype(jnp.float32)
    o_ref[...] = jnp.maximum(y * scale_ref[...] + shift_ref[...] + sc, 0.0
                             ).astype(o_ref.dtype)


def bn_apply_relu(y, scale, shift, shortcut=None, *, out_dtype=jnp.bfloat16, tile_r=2048):
    """y: (C, m_pad) bf16 conv output (channel-major); scale/shift: (C,) f32.

    shortcut (optional): (C, m_pad) bf16. Returns (C, m_pad) in out_dtype.
    Lane-dense blocks (C, tr) with tr an exact 128-multiple divisor of m_pad.
    """
    C, m_pad = y.shape
    tr = _pick_tile(m_pad, tile_r)

    args = [y, scale.reshape(C, 1).astype(jnp.float32),
            shift.reshape(C, 1).astype(jnp.float32)]
    in_specs = [pl.BlockSpec((C, tr), lambda i: (0, i)),
                pl.BlockSpec((C, 1), lambda i: (0, 0)),
                pl.BlockSpec((C, 1), lambda i: (0, 0))]
    kernel = _bn_apply_relu_kernel
    big_bytes = C * m_pad * (2 + jnp.dtype(out_dtype).itemsize)
    if shortcut is not None:
        args.append(shortcut)
        in_specs.append(pl.BlockSpec((C, tr), lambda i: (0, i)))
        kernel = _bn_apply_add_relu_kernel
        big_bytes += C * m_pad * 2

    return pl.pallas_call(
        kernel,
        out_shape=jax.ShapeDtypeStruct((C, m_pad), out_dtype),
        grid=(m_pad // tr,),
        in_specs=in_specs,
        out_specs=pl.BlockSpec((C, tr), lambda i: (0, i)),
        compiler_params=pltpu.CompilerParams(
            dimension_semantics=("parallel",),
            vmem_limit_bytes=_vmem_limit_bytes()),
        cost_estimate=pl.CostEstimate(flops=4 * C * m_pad, transcendentals=0,
                                      bytes_accessed=big_bytes + 2 * C * 4),
    )(*args)


# --------------------------------- JAX glue ------------------------------------

def _im2col_cm(x_cm, stride):
    """3x3 / pad=1 im2col in channel-major layout.

    x_cm: (C, N, H, W).  Returns ((9*C, N*Ho*Wo) with K order (c, kh, kw), (N, Ho, Wo)).
    """
    C, N, H, W = x_cm.shape
    xp = jnp.pad(x_cm, ((0, 0), (0, 0), (1, 1), (1, 1)))
    Ho = (H + 2 - 3) // stride + 1
    Wo = (W + 2 - 3) // stride + 1
    patches = []
    for kh in range(3):
        for kw in range(3):
            patches.append(xp[:, :,
                              kh: kh + stride * (Ho - 1) + 1: stride,
                              kw: kw + stride * (Wo - 1) + 1: stride])
    cols = jnp.stack(patches, axis=1)              # (C, 9, N, Ho, Wo)
    return cols.reshape(C * 9, N * Ho * Wo), (N, Ho, Wo)


def _weight_to_matrix(w_oihw):
    """PyTorch (Cout, Cin, 3, 3) -> (Cout, 9*Cin) matching (cin, kh, kw) column order."""
    cout = w_oihw.shape[0]
    return w_oihw.reshape(cout, -1).astype(jnp.bfloat16)


def _bn_scale_shift(s, ss, gamma, beta, count):
    """Fold training-mode batch stats into per-channel scale/shift (f32, single pass)."""
    mean = s / count
    var = jnp.maximum(ss / count - mean * mean, 0.0)   # clamp: avoid NaN under rsqrt
    scale = gamma * jax.lax.rsqrt(var + _BN_EPS)
    shift = beta - mean * scale
    return scale, shift


@partial(jax.jit, static_argnames=("stride",))
def basic_block_forward(x_nchw, params, *, stride):
    """Exact BasicBlock.forward semantics (training-mode BatchNorm)."""
    N, cin, H, W = x_nchw.shape
    cout = params["w1"].shape[0]

    # channel-major bf16 activations: cast BEFORE im2col -> bf16 9x slab
    x_cm = jnp.transpose(x_nchw, (1, 0, 2, 3)).astype(jnp.bfloat16)   # (Cin, N, H, W)

    # conv1(stride) + bn1 + relu
    cols1, (N, Ho, Wo) = _im2col_cm(x_cm, stride)
    M = N * Ho * Wo
    y1, s1, ss1 = conv_stats(cols1, _weight_to_matrix(params["w1"]))
    scale1, shift1 = _bn_scale_shift(s1, ss1, params["g1"], params["b1"], M)
    out1 = bn_apply_relu(y1, scale1, shift1, out_dtype=jnp.bfloat16)   # (cout, m_pad)
    m_pad = out1.shape[1]
    out1_sp = out1[:, :M].reshape(cout, N, Ho, Wo)                     # no-op slice if M==m_pad

    # shortcut: identity (stride=1) or IdentityPadding (channel pad + 1x1 maxpool stride 2)
    if stride == 2:
        sc = jnp.pad(x_cm, ((0, cout - cin), (0, 0), (0, 0), (0, 0)))[:, :, ::2, ::2]
    else:
        sc = x_cm
    sc = sc.reshape(cout, M)
    if m_pad != M:
        sc = jnp.pad(sc, ((0, 0), (0, m_pad - M)))

    # conv2(stride=1) + bn2 + shortcut add + relu
    cols2, _ = _im2col_cm(out1_sp, 1)
    y2, s2, ss2 = conv_stats(cols2, _weight_to_matrix(params["w2"]))
    scale2, shift2 = _bn_scale_shift(s2, ss2, params["g2"], params["b2"], M)
    out2 = bn_apply_relu(y2, scale2, shift2, shortcut=sc, out_dtype=jnp.float32)
    out2 = out2[:, :M].reshape(cout, N, Ho, Wo)
    return jnp.transpose(out2, (1, 0, 2, 3))                           # CM -> NCHW


def init_params(key, inplanes, planes):
    k1, k2 = jax.random.split(key, 2)
    return {
        "w1": jax.random.normal(k1, (planes, inplanes, 3, 3), jnp.float32) * 0.1,
        "w2": jax.random.normal(k2, (planes, planes, 3, 3), jnp.float32) * 0.1,
        "g1": jnp.ones((planes,), jnp.float32),
        "b1": jnp.zeros((planes,), jnp.float32),
        "g2": jnp.ones((planes,), jnp.float32),
        "b2": jnp.zeros((planes,), jnp.float32),
    }


# -------------------------- pure-JAX f32 reference -----------------------------

def _reference_block(x_nchw, params, stride):
    x = x_nchw.astype(jnp.float32)

    def conv(inp, w, s):
        return jax.lax.conv_general_dilated(
            inp, w, window_strides=(s, s), padding=((1, 1), (1, 1)),
            dimension_numbers=("NCHW", "OIHW", "NCHW"))

    def bn(y, g, b):
        mean = jnp.mean(y, axis=(0, 2, 3), keepdims=True)
        var = jnp.mean((y - mean) ** 2, axis=(0, 2, 3), keepdims=True)
        return ((y - mean) * jax.lax.rsqrt(var + _BN_EPS)
                * g[None, :, None, None] + b[None, :, None, None])

    out = jax.nn.relu(bn(conv(x, params["w1"], stride), params["g1"], params["b1"]))
    out = bn(conv(out, params["w2"], 1), params["g2"], params["b2"])
    if stride == 2:
        cout, cin = params["w1"].shape[0], x.shape[1]
        sc = jnp.pad(x, ((0, 0), (0, cout - cin), (0, 0), (0, 0)))[:, :, ::2, ::2]
    else:
        sc = x
    return jax.nn.relu(out + sc)


# ----------------------------------- demo ---------------------------------------

if __name__ == "__main__":
    key = jax.random.PRNGKey(0)
    kx, kp1, kp2 = jax.random.split(key, 3)

    x = jax.random.normal(kx, (2, 4, 16, 16), jnp.float32)   # NCHW, like PyTorch

    # stride=1 block (inplanes == planes == 4, identity shortcut)
    p1 = init_params(kp1, 4, 4)
    y1 = jax.block_until_ready(basic_block_forward(x, p1, stride=1))
    assert y1.shape == (2, 4, 16, 16)
    r1 = _reference_block(x, p1, 1)
    assert bool(jnp.allclose(y1, r1, atol=0.1, rtol=0.1)), "stride=1 mismatch vs f32 reference"

    # stride=2 block (4 -> 8 channels, IdentityPadding shortcut)
    p2 = init_params(kp2, 4, 8)
    y2 = jax.block_until_ready(basic_block_forward(x, p2, stride=2))
    assert y2.shape == (2, 8, 8, 8)
    r2 = _reference_block(x, p2, 2)
    assert bool(jnp.allclose(y2, r2, atol=0.1, rtol=0.1)), "stride=2 mismatch vs f32 reference"

    print("KERNEL_OK")
</pallas_src>

<mosaic_0001>
module attributes {stable_mosaic.version = 11 : i64} {
  func.func @_conv_stats_kernel(%arg0: i32, %arg1: i32, %arg2: memref<36x512xbf16, #tpu.memory_space<vmem>>, %arg3: memref<4x36xbf16, #tpu.memory_space<vmem>>, %arg4: memref<4x512xbf16, #tpu.memory_space<vmem>>, %arg5: memref<1x4x1xf32, #tpu.memory_space<vmem>>, %arg6: memref<1x4x1xf32, #tpu.memory_space<vmem>>) attributes {dimension_semantics = [#tpu.dimension_semantics<parallel>, #tpu.dimension_semantics<arbitrary>], iteration_bounds = array<i64: 1, 1>, scalar_prefetch = 0 : i64, scratch_operands = 0 : i64, tpu.core_type = #tpu.core_type<tc>, window_params = [{transform_indices = @transform_0, window_bounds = array<i64: 36, 512>}, {pipeline_mode = #tpu.pipeline_mode<synchronous>, transform_indices = @transform_1, window_bounds = array<i64: 4, 36>}, {transform_indices = @transform_2, window_bounds = array<i64: 4, 512>}, {transform_indices = @transform_3, window_bounds = array<i64: 1, 4, 1>}, {transform_indices = @transform_4, window_bounds = array<i64: 1, 4, 1>}]} {
    %c0_i32 = arith.constant 0 : i32
    %0 = arith.cmpi eq, %arg1, %c0_i32 : i32
    %1 = arith.extui %0 : i1 to i32
    %c0_i32_0 = arith.constant 0 : i32
    %2 = arith.cmpi ne, %1, %c0_i32_0 : i32
    scf.if %2 {
      %cst_20 = arith.constant 0.000000e+00 : f32
      %25 = vector.broadcast %cst_20 : f32 to vector<4x1xf32>
      %c0_21 = arith.constant 0 : index
      %c0_22 = arith.constant 0 : index
      %c0_23 = arith.constant 0 : index
      %26 = vector.load %arg5[%c0_21, %c0_22, %c0_23] : memref<1x4x1xf32, #tpu.memory_space<vmem>>, vector<1x4x1xf32>
      %27 = vector.shape_cast %26 : vector<1x4x1xf32> to vector<4x1xf32>
      %28 = vector.shape_cast %25 : vector<4x1xf32> to vector<1x4x1xf32>
      tpu.vector_store %arg5[%c0_21, %c0_22, %c0_23], %28 {strides = array<i32>} : memref<1x4x1xf32, #tpu.memory_space<vmem>>, vector<1x4x1xf32>,
      %cst_24 = arith.constant 0.000000e+00 : f32
      %29 = vector.broadcast %cst_24 : f32 to vector<4x1xf32>
      %c0_25 = arith.constant 0 : index
      %c0_26 = arith.constant 0 : index
      %c0_27 = arith.constant 0 : index
      %30 = vector.load %arg6[%c0_25, %c0_26, %c0_27] : memref<1x4x1xf32, #tpu.memory_space<vmem>>, vector<1x4x1xf32>
      %31 = vector.shape_cast %30 : vector<1x4x1xf32> to vector<4x1xf32>
      %32 = vector.shape_cast %29 : vector<4x1xf32> to vector<1x4x1xf32>
      tpu.vector_store %arg6[%c0_25, %c0_26, %c0_27], %32 {strides = array<i32>} : memref<1x4x1xf32, #tpu.memory_space<vmem>>, vector<1x4x1xf32>,
    } else {
    }
    %c0 = arith.constant 0 : index
    %c0_1 = arith.constant 0 : index
    %3 = vector.load %arg3[%c0, %c0_1] : memref<4x36xbf16, #tpu.memory_space<vmem>>, vector<4x36xbf16>
    %c0_2 = arith.constant 0 : index
    %c0_3 = arith.constant 0 : index
    %4 = vector.load %arg2[%c0_2, %c0_3] : memref<36x512xbf16, #tpu.memory_space<vmem>>, vector<36x512xbf16>
    %cst = arith.constant dense<0.000000e+00> : vector<4x512xf32>
    %5 = tpu.matmul %3, %4, %cst {dimension_numbers = #tpu.dot_dimension_numbers<[1], [0], [0], [1], [0, 0, 1, 1], [], []>} : vector<4x36xbf16>, vector<36x512xbf16>, vector<4x512xf32> -> vector<4x512xf32>
    %c0_4 = arith.constant 0 : index
    %c0_5 = arith.constant 0 : index
    %c0_6 = arith.constant 0 : index
    %6 = vector.load %arg5[%c0_4, %c0_5, %c0_6] : memref<1x4x1xf32, #tpu.memory_space<vmem>>, vector<1x4x1xf32>
    %7 = vector.shape_cast %6 : vector<1x4x1xf32> to vector<4x1xf32>
    %cst_7 = arith.constant dense<0.000000e+00> : vector<4xf32>
    %8 = vector.multi_reduction <add>, %5, %cst_7 [1] : vector<4x512xf32> to vector<4xf32>
    %9 = vector.shape_cast %8 : vector<4xf32> to vector<4x1xf32>
    %10 = arith.addf %7, %9 : vector<4x1xf32>
    %c0_8 = arith.constant 0 : index
    %c0_9 = arith.constant 0 : index
    %c0_10 = arith.constant 0 : index
    %11 = vector.load %arg5[%c0_8, %c0_9, %c0_10] : memref<1x4x1xf32, #tpu.memory_space<vmem>>, vector<1x4x1xf32>
    %12 = vector.shape_cast %11 : vector<1x4x1xf32> to vector<4x1xf32>
    %13 = vector.shape_cast %10 : vector<4x1xf32> to vector<1x4x1xf32>
    tpu.vector_store %arg5[%c0_8, %c0_9, %c0_10], %13 {strides = array<i32>} : memref<1x4x1xf32, #tpu.memory_space<vmem>>, vector<1x4x1xf32>,
    %c0_11 = arith.constant 0 : index
    %c0_12 = arith.constant 0 : index
    %c0_13 = arith.constant 0 : index
    %14 = vector.load %arg6[%c0_11, %c0_12, %c0_13] : memref<1x4x1xf32, #tpu.memory_space<vmem>>, vector<1x4x1xf32>
    %15 = vector.shape_cast %14 : vector<1x4x1xf32> to vector<4x1xf32>
    %16 = arith.mulf %5, %5 : vector<4x512xf32>
    %cst_14 = arith.constant dense<0.000000e+00> : vector<4xf32>
    %17 = vector.multi_reduction <add>, %16, %cst_14 [1] : vector<4x512xf32> to vector<4xf32>
    %18 = vector.shape_cast %17 : vector<4xf32> to vector<4x1xf32>
    %19 = arith.addf %15, %18 : vector<4x1xf32>
    %c0_15 = arith.constant 0 : index
    %c0_16 = arith.constant 0 : index
    %c0_17 = arith.constant 0 : index
    %20 = vector.load %arg6[%c0_15, %c0_16, %c0_17] : memref<1x4x1xf32, #tpu.memory_space<vmem>>, vector<1x4x1xf32>
    %21 = vector.shape_cast %20 : vector<1x4x1xf32> to vector<4x1xf32>
    %22 = vector.shape_cast %19 : vector<4x1xf32> to vector<1x4x1xf32>
    tpu.vector_store %arg6[%c0_15, %c0_16, %c0_17], %22 {strides = array<i32>} : memref<1x4x1xf32, #tpu.memory_space<vmem>>, vector<1x4x1xf32>,
    %23 = arith.truncf %5 : vector<4x512xf32> to vector<4x512xbf16>
    %c0_18 = arith.constant 0 : index
    %c0_19 = arith.constant 0 : index
    %24 = vector.load %arg4[%c0_18, %c0_19] : memref<4x512xbf16, #tpu.memory_space<vmem>>, vector<4x512xbf16>
    tpu.vector_store %arg4[%c0_18, %c0_19], %23 {strides = array<i32>} : memref<4x512xbf16, #tpu.memory_space<vmem>>, vector<4x512xbf16>,
    return
  }
  func.func @transform_0(%arg0: i32, %arg1: i32) -> (i32, i32) {
    %c1_i32 = arith.constant 1 : i32
    %0 = arith.muli %arg0, %c1_i32 : i32
    %1 = arith.addi %0, %arg1 : i32
    %c0_i32 = arith.constant 0 : i32
    %c0_i32_0 = arith.constant 0 : i32
    return %c0_i32, %1 : i32, i32
  }
  func.func @transform_1(%arg0: i32, %arg1: i32) -> (i32, i32) {
    %c0_i32 = arith.constant 0 : i32
    %c0_i32_0 = arith.constant 0 : i32
    %c0_i32_1 = arith.constant 0 : i32
    return %c0_i32, %c0_i32_0 : i32, i32
  }
  func.func @transform_2(%arg0: i32, %arg1: i32) -> (i32, i32) {
    %c1_i32 = arith.constant 1 : i32
    %0 = arith.muli %arg0, %c1_i32 : i32
    %1 = arith.addi %0, %arg1 : i32
    %c0_i32 = arith.constant 0 : i32
    %c0_i32_0 = arith.constant 0 : i32
    return %c0_i32, %1 : i32, i32
  }
  func.func @transform_3(%arg0: i32, %arg1: i32) -> (i32, i32, i32) {
    %c0_i32 = arith.constant 0 : i32
    %c0_i32_0 = arith.constant 0 : i32
    %c0_i32_1 = arith.constant 0 : i32
    return %arg0, %c0_i32, %c0_i32_0 : i32, i32, i32
  }
  func.func @transform_4(%arg0: i32, %arg1: i32) -> (i32, i32, i32) {
    %c0_i32 = arith.constant 0 : i32
    %c0_i32_0 = arith.constant 0 : i32
    %c0_i32_1 = arith.constant 0 : i32
    return %arg0, %c0_i32, %c0_i32_0 : i32, i32, i32
  }
}

module attributes {stable_mosaic.version = 11 : i64} {
  func.func @_bn_apply_relu_kernel(%arg0: i32, %arg1: memref<4x512xbf16, #tpu.memory_space<vmem>>, %arg2: memref<4x1xf32, #tpu.memory_space<vmem>>, %arg3: memref<4x1xf32, #tpu.memory_space<vmem>>, %arg4: memref<4x512xbf16, #tpu.memory_space<vmem>>) attributes {dimension_semantics = [#tpu.dimension_semantics<parallel>], iteration_bounds = array<i64: 1>, scalar_prefetch = 0 : i64, scratch_operands = 0 : i64, tpu.core_type = #tpu.core_type<tc>, window_params = [{transform_indices = @transform_0, window_bounds = array<i64: 4, 512>}, {pipeline_mode = #tpu.pipeline_mode<synchronous>, transform_indices = @transform_1, window_bounds = array<i64: 4, 1>}, {pipeline_mode = #tpu.pipeline_mode<synchronous>, transform_indices = @transform_2, window_bounds = array<i64: 4, 1>}, {transform_indices = @transform_3, window_bounds = array<i64: 4, 512>}]} {
    %c0 = arith.constant 0 : index
    %c0_0 = arith.constant 0 : index
    %0 = vector.load %arg1[%c0, %c0_0] : memref<4x512xbf16, #tpu.memory_space<vmem>>, vector<4x512xbf16>
    %1 = arith.extf %0 : vector<4x512xbf16> to vector<4x512xf32>
    %c0_1 = arith.constant 0 : index
    %c0_2 = arith.constant 0 : index
    %2 = vector.load %arg2[%c0_1, %c0_2] : memref<4x1xf32, #tpu.memory_space<vmem>>, vector<4x1xf32>
    %3 = vector.broadcast %2 : vector<4x1xf32> to vector<4x512xf32>
    %4 = arith.mulf %1, %3 : vector<4x512xf32>
    %c0_3 = arith.constant 0 : index
    %c0_4 = arith.constant 0 : index
    %5 = vector.load %arg3[%c0_3, %c0_4] : memref<4x1xf32, #tpu.memory_space<vmem>>, vector<4x1xf32>
    %6 = vector.broadcast %5 : vector<4x1xf32> to vector<4x512xf32>
    %7 = arith.addf %4, %6 : vector<4x512xf32>
    %cst = arith.constant 0.000000e+00 : f32
    %8 = vector.broadcast %cst : f32 to vector<4x512xf32>
    %9 = arith.maximumf %7, %8 : vector<4x512xf32>
    %10 = arith.truncf %9 : vector<4x512xf32> to vector<4x512xbf16>
    %c0_5 = arith.constant 0 : index
    %c0_6 = arith.constant 0 : index
    %11 = vector.load %arg4[%c0_5, %c0_6] : memref<4x512xbf16, #tpu.memory_space<vmem>>, vector<4x512xbf16>
    tpu.vector_store %arg4[%c0_5, %c0_6], %10 {strides = array<i32>} : memref<4x512xbf16, #tpu.memory_space<vmem>>, vector<4x512xbf16>,
    return
  }
  func.func @transform_0(%arg0: i32) -> (i32, i32) {
    %c0_i32 = arith.constant 0 : i32
    %c0_i32_0 = arith.constant 0 : i32
    return %c0_i32, %arg0 : i32, i32
  }
  func.func @transform_1(%arg0: i32) -> (i32, i32) {
    %c0_i32 = arith.constant 0 : i32
    %c0_i32_0 = arith.constant 0 : i32
    %c0_i32_1 = arith.constant 0 : i32
    return %c0_i32, %c0_i32_0 : i32, i32
  }
  func.func @transform_2(%arg0: i32) -> (i32, i32) {
    %c0_i32 = arith.constant 0 : i32
    %c0_i32_0 = arith.constant 0 : i32
    %c0_i32_1 = arith.constant 0 : i32
    return %c0_i32, %c0_i32_0 : i32, i32
  }
  func.func @transform_3(%arg0: i32) -> (i32, i32) {
    %c0_i32 = arith.constant 0 : i32
    %c0_i32_0 = arith.constant 0 : i32
    return %c0_i32, %arg0 : i32, i32
  }
}

module attributes {stable_mosaic.version = 11 : i64} {
  func.func @_bn_apply_add_relu_kernel(%arg0: i32, %arg1: memref<4x512xbf16, #tpu.memory_space<vmem>>, %arg2: memref<4x1xf32, #tpu.memory_space<vmem>>, %arg3: memref<4x1xf32, #tpu.memory_space<vmem>>, %arg4: memref<4x512xbf16, #tpu.memory_space<vmem>>, %arg5: memref<4x512xf32, #tpu.memory_space<vmem>>) attributes {dimension_semantics = [#tpu.dimension_semantics<parallel>], iteration_bounds = array<i64: 1>, scalar_prefetch = 0 : i64, scratch_operands = 0 : i64, tpu.core_type = #tpu.core_type<tc>, window_params = [{transform_indices = @transform_0, window_bounds = array<i64: 4, 512>}, {pipeline_mode = #tpu.pipeline_mode<synchronous>, transform_indices = @transform_1, window_bounds = array<i64: 4, 1>}, {pipeline_mode = #tpu.pipeline_mode<synchronous>, transform_indices = @transform_2, window_bounds = array<i64: 4, 1>}, {transform_indices = @transform_3, window_bounds = array<i64: 4, 512>}, {transform_indices = @transform_4, window_bounds = array<i64: 4, 512>}]} {
    %c0 = arith.constant 0 : index
    %c0_0 = arith.constant 0 : index
    %0 = vector.load %arg1[%c0, %c0_0] : memref<4x512xbf16, #tpu.memory_space<vmem>>, vector<4x512xbf16>
    %1 = arith.extf %0 : vector<4x512xbf16> to vector<4x512xf32>
    %c0_1 = arith.constant 0 : index
    %c0_2 = arith.constant 0 : index
    %2 = vector.load %arg4[%c0_1, %c0_2] : memref<4x512xbf16, #tpu.memory_space<vmem>>, vector<4x512xbf16>
    %3 = arith.extf %2 : vector<4x512xbf16> to vector<4x512xf32>
    %c0_3 = arith.constant 0 : index
    %c0_4 = arith.constant 0 : index
    %4 = vector.load %arg2[%c0_3, %c0_4] : memref<4x1xf32, #tpu.memory_space<vmem>>, vector<4x1xf32>
    %5 = vector.broadcast %4 : vector<4x1xf32> to vector<4x512xf32>
    %6 = arith.mulf %1, %5 : vector<4x512xf32>
    %c0_5 = arith.constant 0 : index
    %c0_6 = arith.constant 0 : index
    %7 = vector.load %arg3[%c0_5, %c0_6] : memref<4x1xf32, #tpu.memory_space<vmem>>, vector<4x1xf32>
    %8 = vector.broadcast %7 : vector<4x1xf32> to vector<4x512xf32>
    %9 = arith.addf %6, %8 : vector<4x512xf32>
    %10 = arith.addf %9, %3 : vector<4x512xf32>
    %cst = arith.constant 0.000000e+00 : f32
    %11 = vector.broadcast %cst : f32 to vector<4x512xf32>
    %12 = arith.maximumf %10, %11 : vector<4x512xf32>
    %c0_7 = arith.constant 0 : index
    %c0_8 = arith.constant 0 : index
    %13 = vector.load %arg5[%c0_7, %c0_8] : memref<4x512xf32, #tpu.memory_space<vmem>>, vector<4x512xf32>
    tpu.vector_store %arg5[%c0_7, %c0_8], %12 {strides = array<i32>} : memref<4x512xf32, #tpu.memory_space<vmem>>, vector<4x512xf32>,
    return
  }
  func.func @transform_0(%arg0: i32) -> (i32, i32) {
    %c0_i32 = arith.constant 0 : i32
    %c0_i32_0 = arith.constant 0 : i32
    return %c0_i32, %arg0 : i32, i32
  }
  func.func @transform_1(%arg0: i32) -> (i32, i32) {
    %c0_i32 = arith.constant 0 : i32
    %c0_i32_0 = arith.constant 0 : i32
    %c0_i32_1 = arith.constant 0 : i32
    return %c0_i32, %c0_i32_0 : i32, i32
  }
  func.func @transform_2(%arg0: i32) -> (i32, i32) {
    %c0_i32 = arith.constant 0 : i32
    %c0_i32_0 = arith.constant 0 : i32
    %c0_i32_1 = arith.constant 0 : i32
    return %c0_i32, %c0_i32_0 : i32, i32
  }
  func.func @transform_3(%arg0: i32) -> (i32, i32) {
    %c0_i32 = arith.constant 0 : i32
    %c0_i32_0 = arith.constant 0 : i32
    return %c0_i32, %arg0 : i32, i32
  }
  func.func @transform_4(%arg0: i32) -> (i32, i32) {
    %c0_i32 = arith.constant 0 : i32
    %c0_i32_0 = arith.constant 0 : i32
    return %c0_i32, %arg0 : i32, i32
  }
}

</mosaic_0001>

<llo_original>
// kernel: basic_block_forward.5
$region0: #{basic_block_forward.5}
  #allocation0 [shape = 'u32[]', space=smem, size = 0x4, offset = 0x4, fixed_abs, tag = 'smem constant byte address 0x4 - core index']
  #allocation1 [shape = 'u32[144,128]{1,0:T(1,128)}', space=vmem, size = 0x12000, scoped, tag = 'internal scratch']
  %s0 = inlined_call_operand.vmem [shape: bf16[4,512], index: 0, kind: input, shape index: {}]
  %s1 = inlined_call_operand.vmem [shape: f32[4,1], index: 1, kind: input, shape index: {}]
  %s2 = inlined_call_operand.vmem [shape: f32[4,1], index: 2, kind: input, shape index: {}]
  %s3 = inlined_call_operand.vmem [shape: bf16[4,512], index: 3, kind: output, shape index: {}]
  %s4 = sld [smem:[#allocation0]]
  $region22: #{basic_block_forward.5} parent=0
    _
  %s6 = ssub.s32 1, %s4
  %s7 = scalar_select 0, %s6, %s4
  // Predicated region
  $region2: #{basic_block_forward.5} parent=0 // pred_check
    _
  $region3: #{basic_block_forward.5} parent=0 // pred_check_branch
    %9 = sbr.rel (0) target = $region5
  $region4: #{basic_block_forward.5} parent=0 // pred_region
    _
  $region5: #{basic_block_forward.5} parent=0 // pred_fallthru
    _
  // Predicated region
  $region6: #{basic_block_forward.5} parent=0 // pred_check
    _
  $region7: #{basic_block_forward.5} parent=0 // pred_check_branch
    %11 = sbr.rel (0) target = $region9
  $region8: #{basic_block_forward.5} parent=0 // pred_region
    _
  $region9: #{basic_block_forward.5} parent=0 // pred_fallthru
    _
  // Predicated region
  $region10: #{basic_block_forward.5} parent=0 // pred_check
    _
  $region11: #{basic_block_forward.5} parent=0 // pred_check_branch
    %13 = sbr.rel (0) target = $region13
  $region12: #{basic_block_forward.5} parent=0 // pred_region
    _
  $region13: #{basic_block_forward.5} parent=0 // pred_fallthru
    _
  %v14 = vld [vmem:[%s0] sm:$0xff]
  %v15 = vunpack.c.l.bf16 %v14
  %v16 = vunpack.c.h.bf16 %v14
  %v17 = vld [vmem:[%s1] sm:$0xf]
  %19 = vset.pattern.permute.xlu0 0
  %20 = vperm.xlu0 %19, %v17
  %v21 = vpop.permute.xlu0 %20
  %v23 = vunpack.c.l.s4 839922192
  %v24 = vunpack.c.0.s8 %v23
  %v25 = vlaneseq
  %v26 = vshrl.u32 %v25, 7
  %v27 = vsub.s32 %v24, %v26
  %v28 = vrot.slane %v21, %v27
  %v30 = vmul.f32 %v15, %v28
  %v31 = vmul.f32 %v16, %v28
  %v32 = vld [vmem:[%s2] sm:$0xf]
  %34 = vset.pattern.permute.xlu0 0
  %35 = vperm.xlu0 %34, %v32
  %v36 = vpop.permute.xlu0 %35
  %v38 = vunpack.c.l.s4 839922192
  %v39 = vunpack.c.0.s8 %v38
  %v40 = vlaneseq
  %v41 = vshrl.u32 %v40, 7
  %v42 = vsub.s32 %v39, %v41
  %v43 = vrot.slane %v36, %v42
  %v45 = vadd.f32 %v30, %v43
  %v46 = vadd.f32 %v31, %v43
  %v47 = vmax.f32 %v45, 0.0
  %v48 = vmax.f32 %v46, 0.0
  %v51 = vcombine.high %v47, %v47
  %v52 = vcombine.high %v48, %v48
  %v55 = vpack.c.bf16 %v47, %v47
  %v56 = vpack.c.bf16 %v51, %v51
  %v57 = vpack.c.bf16 %v48, %v48
  %v58 = vpack.c.bf16 %v52, %v52
  %v63 = vcombine.low %v55, %v56
  %v64 = vcombine.low %v57, %v58
  %v66 = vunpack.c.l.s4 1983009808
  %v67 = vunpack.c.0.s8 %v66
  %v68 = vlaneseq
  %v69 = vshrl.u32 %v68, 7
  %v70 = vsub.s32 %v67, %v69
  %v71 = vrot.slane %v63, %v70
  %v73 = vunpack.c.l.s4 1983009808
  %v74 = vunpack.c.0.s8 %v73
  %v75 = vlaneseq
  %v76 = vshrl.u32 %v75, 7
  %v77 = vsub.s32 %v74, %v76
  %v78 = vrot.slane %v64, %v77
  %v79 = vcombine.low %v71, %v78
  %81 = vst [vmem:[%s3] sm:$0xff] %v79
  // Predicated region
  $region14: #{basic_block_forward.5} parent=0 // pred_check
    _
  $region15: #{basic_block_forward.5} parent=0 // pred_check_branch
    %83 = sbr.rel (0) target = $region17
  $region16: #{basic_block_forward.5} parent=0 // pred_region
    _
  $region17: #{basic_block_forward.5} parent=0 // pred_fallthru
    _
  // Predicated region
  $region18: #{basic_block_forward.5} parent=0 // pred_check
    _
  $region19: #{basic_block_forward.5} parent=0 // pred_check_branch
    %85 = sbr.rel (0) target = $region21
  $region20: #{basic_block_forward.5} parent=0 // pred_region
    _
  $region21: #{basic_block_forward.5} parent=0 // pred_fallthru
    _

// kernel: basic_block_forward.4
$region0: #{basic_block_forward.4}
  #allocation0 [shape = 'u32[]', space=smem, size = 0x4, offset = 0x4, fixed_abs, tag = 'smem constant byte address 0x4 - core index']
  #allocation1 [shape = 'u32[144,128]{1,0:T(1,128)}', space=vmem, size = 0x12000, scoped, tag = 'internal scratch']
  %s0 = inlined_call_operand.vmem [shape: bf16[36,512], index: 0, kind: input, shape index: {}]
  %s1 = inlined_call_operand.vmem [shape: bf16[4,36], index: 1, kind: input, shape index: {}]
  %s2 = inlined_call_operand.vmem [shape: bf16[4,512], index: 2, kind: output, shape index: {0}]
  %s3 = inlined_call_operand.vmem [shape: f32[1,4,1], index: 3, kind: output, shape index: {1}]
  %s4 = inlined_call_operand.vmem [shape: f32[1,4,1], index: 4, kind: output, shape index: {2}]
  %5 = xla_tuple %s2, %s3, %s4
  %s6 = sld [smem:[#allocation0]]
  $region38: #{basic_block_forward.4} parent=0
    _
  %s8 = ssub.s32 1, %s6
  %s9 = scalar_select 0, %s8, %s6
  // Predicated region
  $region2: #{basic_block_forward.4} parent=0 // pred_check
    _
  $region3: #{basic_block_forward.4} parent=0 // pred_check_branch
    %11 = sbr.rel (0) target = $region5
  $region4: #{basic_block_forward.4} parent=0 // pred_region
    %s12 = sadd.s32 0, 0
    %s13 = smul.u32 4, %s12
    %p14 = scmp.lt.s32.totalorder %s13, 3
    %s15 = scalar_select %p14, %s13, 3
    %s16 = smul.addr %s15, 4
    %s17 = scalar_lea.vmem %s0, %s16
    %s18 = sadd.s32 0, 0
    %s19 = smul.u32 4, %s18
  $region5: #{basic_block_forward.4} parent=0 // pred_fallthru
    _
  // Predicated region
  $region6: #{basic_block_forward.4} parent=0 // pred_check
    _
  $region7: #{basic_block_forward.4} parent=0 // pred_check_branch
    %21 = sbr.rel (0) target = $region9
  $region8: #{basic_block_forward.4} parent=0 // pred_region
    _
  $region9: #{basic_block_forward.4} parent=0 // pred_fallthru
    _
  %s22 = sadd.s32 0, 0
  %s23 = smul.u32 4, %s22
  %p24 = scmp.lt.s32.totalorder %s23, 3
  %s25 = scalar_select %p24, %s23, 3
  %s26 = smul.addr %s25, 4
  %s27 = scalar_lea.vmem %s0, %s26
  %s28 = sadd.s32 0, 0
  %s29 = smul.u32 4, %s28
  %p30 = scmp.lt.s32.totalorder %s29, 3
  %s31 = scalar_select %p30, %s29, 3
  %s32 = smul.addr %s31, 2
  %s33 = scalar_lea.vmem %s2, %s32
  %s34 = sadd.s32 0, 0
  %s35 = smul.u32 4, %s34
  %p36 = scmp.lt.s32.totalorder %s35, 3
  %s37 = scalar_select %p36, %s35, 3
  %s38 = smul.addr %s37, 4
  %s39 = scalar_lea.vmem %s0, %s38
  %s40 = sadd.s32 0, 0
  %s41 = smul.u32 4, %s40
  %s42 = sadd.s32 0, 0
  %s43 = smul.u32 4, %s42
  %p44 = scmp.lt.s32.totalorder %s43, 3
  %s45 = scalar_select %p44, %s43, 3
  %s46 = smul.addr %s45, 2
  %s47 = scalar_lea.vmem %s2, %s46
  %s48 = sadd.s32 0, 0
  %s49 = smul.u32 4, %s48
  %p51 = scmp.eq.s32.totalorder 0, 0
  // Predicated region
  $region10: #{basic_block_forward.4} parent=0 // pred_check
    %p52 = pneg %p51
  $region11: #{basic_block_forward.4} parent=0 // pred_check_branch
    %54 = sbr.rel (%p52) target = $region13
  $region12: #{basic_block_forward.4} parent=0 // pred_region
    %vm55 = vcmask 3072
    %56 = vst.msk [vmem:[%s3] sm:$0xf] %vm55, 0.0
    %57 = vst.msk [vmem:[%s4] sm:$0xf] %vm55, 0.0
  $region13: #{basic_block_forward.4} parent=0 // pred_fallthru
    _
  %v58 = vld [vmem:[%s1] sm:$0x3]
  %v59 = vld [vmem:[%s39] sm:$0xff]
  %v60 = vld [vmem:[%s39 + $0x8] sm:$0xff]
  %v61 = vld [vmem:[%s39 + $0x10] sm:$0xff]
  %v62 = vld [vmem:[%s39 + $0x18] sm:$0xff]
  %v63 = vld [vmem:[%s39 + $0x20] sm:$0xff]
  %v64 = vld [vmem:[%s39 + $0x28] sm:$0xff]
  %v65 = vld [vmem:[%s39 + $0x30] sm:$0xff]
  %v66 = vld [vmem:[%s39 + $0x38] sm:$0xff]
  %v67 = vld [vmem:[%s39 + $0x40] sm:$0x33]
  %v68 = vld [vmem:[%s39 + $0x48] sm:$0x33]
  %v79 = vunpack.c.l.b16 %v59
  %v80 = vunpack.c.h.b16 %v59
  %v81 = vunpack.c.l.b16 %v60
  %v82 = vunpack.c.h.b16 %v60
  %v83 = vunpack.c.l.b16 %v61
  %v84 = vunpack.c.h.b16 %v61
  %v85 = vunpack.c.l.b16 %v62
  %v86 = vunpack.c.h.b16 %v62
  %v87 = vunpack.c.l.b16 %v63
  %v88 = vunpack.c.h.b16 %v63
  %v89 = vunpack.c.l.b16 %v64
  %v90 = vunpack.c.h.b16 %v64
  %v91 = vunpack.c.l.b16 %v65
  %v92 = vunpack.c.h.b16 %v65
  %v93 = vunpack.c.l.b16 %v66
  %v94 = vunpack.c.h.b16 %v66
  %v95 = vunpack.c.l.b16 %v67
  %v96 = vunpack.c.h.b16 %v67
  %v97 = vunpack.c.l.b16 %v68
  %v98 = vunpack.c.h.b16 %v68
  %v99 = vpack.c.b16 %v83, %v79
  %v100 = vpack.c.b16 %v84, %v80
  %v101 = vpack.c.b16 %v85, %v81
  %v102 = vpack.c.b16 %v86, %v82
  %v103 = vpack.c.b16 %v91, %v87
  %v104 = vpack.c.b16 %v92, %v88
  %v105 = vpack.c.b16 %v93, %v89
  %v106 = vpack.c.b16 %v94, %v90
  %v107 = vpack.c.b16 %v95, %v95
  %v108 = vpack.c.b16 %v96, %v96
  %v109 = vpack.c.b16 %v97, %v97
  %v110 = vpack.c.b16 %v98, %v98
  %vm119 = vcmask 293888
  %v121 = vsel %vm119, %v58, 0
  %vm123 = vcmask 1041408
  %v125 = vsel %vm123, %v107, 0
  %v128 = vsel %vm123, %v108, 0
  %v131 = vsel %vm123, %v109, 0
  %v134 = vsel %vm123, %v110, 0
  %136 = vmatprep.subr.bf16.mxu0 %v100
  %137 = vmatpush1.bf16.msra.mxu0 %v99
  %138 = vmatprep.subr.bf16.mxu0 %v104
  %139 = vmatpush1.bf16.msra.mxu0 %v103
  %140 = vmatprep.subr.bf16.mxu0 %v128
  %141 = vmatpush1.bf16.msra.mxu0 %v125
  %142 = vmatprep.subr.bf16.mxu0 0
  %143 = vmatpush1.bf16.msra.mxu0 0
  %144 = vmatprep.subr.bf16.mxu0 0
  %145 = vmatpush1.bf16.msra.mxu0 0
  %146 = vmatprep.subr.bf16.mxu0 0
  %147 = vmatpush1.bf16.msra.mxu0 0
  %148 = vmatprep.subr.bf16.mxu0 0
  %149 = vmatpush1.bf16.msra.mxu0 0
  %150 = vmatprep.subr.bf16.mxu0 0
  %151 = vmatpush1.bf16.msra.mxu0 0
  %152 = vmatprep.subr.bf16.mxu0 0
  %153 = vmatpush1.bf16.msra.mxu0 0
  %154 = vmatprep.subr.bf16.mxu0 0
  %155 = vmatpush1.bf16.msra.mxu0 0
  %156 = vmatprep.subr.bf16.mxu0 0
  %157 = vmatpush1.bf16.msra.mxu0 0
  %158 = vmatprep.subr.bf16.mxu0 0
  %159 = vmatpush1.bf16.msra.mxu0 0
  %160 = vmatprep.subr.bf16.mxu0 0
  %161 = vmatpush1.bf16.msra.mxu0 0
  %162 = vmatprep.subr.bf16.mxu0 0
  %163 = vmatpush1.bf16.msra.mxu0 0
  %164 = vmatprep.subr.bf16.mxu0 0
  %165 = vmatpush1.bf16.msra.mxu0 0
  %166 = vmatprep.subr.bf16.mxu0 0
  %167 = vmatpush1.bf16.msra.mxu0 0
  %168 = vmatprep.mubr.bf16.mxu0 0
  %169 = vmatmul.mubr.bf16.gmra.mrb[0].mxu0 %v121
  %v170 = vpop.f32.mrb[0].mxu0
  %v171 = vadd.f32 0.0, %v170
  %v172 = vpop.f32.mrb[0].mxu0
  %v173 = vadd.f32 0.0, %v172
  %v174 = vpop.f32.mrb[0].mxu0
  %v175 = vpop.f32.mrb[0].mxu0
  %176 = vdwg.mxu0
  %177 = vmatprep.subr.bf16.mxu0 %v102
  %178 = vmatpush1.bf16.msra.mxu0 %v101
  %179 = vmatprep.subr.bf16.mxu0 %v106
  %180 = vmatpush1.bf16.msra.mxu0 %v105
  %181 = vmatprep.subr.bf16.mxu0 %v134
  %182 = vmatpush1.bf16.msra.mxu0 %v131
  %183 = vmatprep.subr.bf16.mxu0 0
  %184 = vmatpush1.bf16.msra.mxu0 0
  %185 = vmatprep.subr.bf16.mxu0 0
  %186 = vmatpush1.bf16.msra.mxu0 0
  %187 = vmatprep.subr.bf16.mxu0 0
  %188 = vmatpush1.bf16.msra.mxu0 0
  %189 = vmatprep.subr.bf16.mxu0 0
  %190 = vmatpush1.bf16.msra.mxu0 0
  %191 = vmatprep.subr.bf16.mxu0 0
  %192 = vmatpush1.bf16.msra.mxu0 0
  %193 = vmatprep.subr.bf16.mxu0 0
  %194 = vmatpush1.bf16.msra.mxu0 0
  %195 = vmatprep.subr.bf16.mxu0 0
  %196 = vmatpush1.bf16.msra.mxu0 0
  %197 = vmatprep.subr.bf16.mxu0 0
  %198 = vmatpush1.bf16.msra.mxu0 0
  %199 = vmatprep.subr.bf16.mxu0 0
  %200 = vmatpush1.bf16.msra.mxu0 0
  %201 = vmatprep.subr.bf16.mxu0 0
  %202 = vmatpush1.bf16.msra.mxu0 0
  %203 = vmatprep.subr.bf16.mxu0 0
  %204 = vmatpush1.bf16.msra.mxu0 0
  %205 = vmatprep.subr.bf16.mxu0 0
  %206 = vmatpush1.bf16.msra.mxu0 0
  %207 = vmatprep.subr.bf16.mxu0 0
  %208 = vmatpush1.bf16.msra.mxu0 0
  %209 = vmatprep.mubr.bf16.mxu0 0
  %210 = vmatmul.mubr.bf16.gmra.mrb[0].mxu0 %v121
  %v211 = vpop.f32.mrb[0].mxu0
  %v212 = vadd.f32 0.0, %v211
  %v213 = vpop.f32.mrb[0].mxu0
  %v214 = vadd.f32 0.0, %v213
  %v215 = vpop.f32.mrb[0].mxu0
  %v216 = vpop.f32.mrb[0].mxu0
  %217 = vdwg.mxu0
  %v218 = vld [vmem:[%s3] sm:$0xf]
  %vm219 = vcmask 1043456
  %v220 = vsel %vm219, %v171, 0.0
  %v221 = vsel %vm219, %v173, 0.0
  %v222 = vadd.f32 %v220, %v221
  %v223 = vsel %vm219, %v212, 0.0
  %v224 = vadd.f32 %v222, %v223
  %v225 = vsel %vm219, %v214, 0.0
  %v226 = vadd.f32 %v224, %v225
  %227 = vadd.xlane.f32.xlu0 %v226
  %v228 = vpop.xlane.xlu0 %227
  %v229 = vadd.f32 %v218, %v228
  %vm230 = vcmask 3072
  %231 = vst.msk [vmem:[%s3] sm:$0xf] %vm230, %v229
  %v232 = vld [vmem:[%s4] sm:$0xf]
  %v233 = vmul.f32 %v171, %v171
  %v234 = vmul.f32 %v173, %v173
  %v235 = vmul.f32 %v212, %v212
  %v236 = vmul.f32 %v214, %v214
  %v237 = vsel %vm219, %v233, 0.0
  %v238 = vsel %vm219, %v234, 0.0
  %v239 = vadd.f32 %v237, %v238
  %v240 = vsel %vm219, %v235, 0.0
  %v241 = vadd.f32 %v239, %v240
  %v242 = vsel %vm219, %v236, 0.0
  %v243 = vadd.f32 %v241, %v242
  %244 = vadd.xlane.f32.xlu0 %v243
  %v245 = vpop.xlane.xlu0 %244
  %v246 = vadd.f32 %v232, %v245
  %247 = vst.msk [vmem:[%s4] sm:$0xf] %vm230, %v246
  %v248 = vpack.c.bf16 %v171, %v171
  %v249 = vpack.c.bf16 %v173, %v173
  %v250 = vpack.c.bf16 %v212, %v212
  %v251 = vpack.c.bf16 %v214, %v214
  %v256 = vcombine.low %v248, %v249
  %v257 = vcombine.low %v250, %v251
  %v259 = vunpack.c.l.s4 1983009808
  %v260 = vunpack.c.0.s8 %v259
  %v261 = vlaneseq
  %v262 = vshrl.u32 %v261, 7
  %v263 = vsub.s32 %v260, %v262
  %v264 = vrot.slane %v256, %v263
  %v266 = vunpack.c.l.s4 1983009808
  %v267 = vunpack.c.0.s8 %v266
  %v268 = vlaneseq
  %v269 = vshrl.u32 %v268, 7
  %v270 = vsub.s32 %v267, %v269
  %v271 = vrot.slane %v257, %v270
  %v272 = vcombine.low %v264, %v271
  %274 = vst [vmem:[%s47] sm:$0xff] %v272
  %s275 = sadd.s32 0, 0
  %s276 = smul.u32 4, %s275
  %p277 = scmp.lt.s32.totalorder %s276, 3
  %s278 = scalar_select %p277, %s276, 3
  %s279 = smul.addr %s278, 2
  %s280 = scalar_lea.vmem %s2, %s279
  // Predicated region
  $region14: #{basic_block_forward.4} parent=0 // pred_check
    _
  $region15: #{basic_block_forward.4} parent=0 // pred_check_branch
    %282 = sbr.rel (0) target = $region17
  $region16: #{basic_block_forward.4} parent=0 // pred_region
    %s283 = sadd.s32 0, 0
    %s284 = smul.u32 4, %s283
  $region17: #{basic_block_forward.4} parent=0 // pred_fallthru
    _
  // Predicated region
  $region18: #{basic_block_forward.4} parent=0 // pred_check
    _
  $region19: #{basic_block_forward.4} parent=0 // pred_check_branch
    %286 = sbr.rel (0) target = $region21
  $region20: #{basic_block_forward.4} parent=0 // pred_region
    _
  $region21: #{basic_block_forward.4} parent=0 // pred_fallthru
    _
  // Predicated region
  $region22: #{basic_block_forward.4} parent=0 // pred_check
    _
  $region23: #{basic_block_forward.4} parent=0 // pred_check_branch
    %288 = sbr.rel (0) target = $region25
  $region24: #{basic_block_forward.4} parent=0 // pred_region
    _
  $region25: #{basic_block_forward.4} parent=0 // pred_fallthru
    _
  // Predicated region
  $region26: #{basic_block_forward.4} parent=0 // pred_check
    _
  $region27: #{basic_block_forward.4} parent=0 // pred_check_branch
    %290 = sbr.rel (0) target = $region29
  $region28: #{basic_block_forward.4} parent=0 // pred_region
    %s291 = sadd.s32 0, 0
    %s292 = smul.u32 4, %s291
    %p293 = scmp.lt.s32.totalorder %s292, 3
    %s294 = scalar_select %p293, %s292, 3
    %s295 = smul.addr %s294, 2
    %s296 = scalar_lea.vmem %s2, %s295
  $region29: #{basic_block_forward.4} parent=0 // pred_fallthru
    _
  // Predicated region
  $region30: #{basic_block_forward.4} parent=0 // pred_check
    _
  $region31: #{basic_block_forward.4} parent=0 // pred_check_branch
    %298 = sbr.rel (0) target = $region33
  $region32: #{basic_block_forward.4} parent=0 // pred_region
    _
  $region33: #{basic_block_forward.4} parent=0 // pred_fallthru
    _
  // Predicated region
  $region34: #{basic_block_forward.4} parent=0 // pred_check
    _
  $region35: #{basic_block_forward.4} parent=0 // pred_check_branch
    %300 = sbr.rel (0) target = $region37
  $region36: #{basic_block_forward.4} parent=0 // pred_region
    _
  $region37: #{basic_block_forward.4} parent=0 // pred_fallthru
    _

// kernel: basic_block_forward.7
$region0: #{basic_block_forward.7}
  #allocation0 [shape = 'u32[]', space=smem, size = 0x4, offset = 0x4, fixed_abs, tag = 'smem constant byte address 0x4 - core index']
  #allocation1 [shape = 'u32[144,128]{1,0:T(1,128)}', space=vmem, size = 0x12000, scoped, tag = 'internal scratch']
  %s0 = inlined_call_operand.vmem [shape: bf16[4,512], index: 0, kind: input, shape index: {}]
  %s1 = inlined_call_operand.vmem [shape: f32[4,1], index: 1, kind: input, shape index: {}]
  %s2 = inlined_call_operand.vmem [shape: f32[4,1], index: 2, kind: input, shape index: {}]
  %s3 = inlined_call_operand.vmem [shape: bf16[4,512], index: 3, kind: input, shape index: {}]
  %s4 = inlined_call_operand.vmem [shape: f32[4,512], index: 4, kind: output, shape index: {}]
  %s5 = sld [smem:[#allocation0]]
  $region26: #{basic_block_forward.7} parent=0
    _
  %s7 = ssub.s32 1, %s5
  %s8 = scalar_select 0, %s7, %s5
  // Predicated region
  $region2: #{basic_block_forward.7} parent=0 // pred_check
    _
  $region3: #{basic_block_forward.7} parent=0 // pred_check_branch
    %10 = sbr.rel (0) target = $region5
  $region4: #{basic_block_forward.7} parent=0 // pred_region
    _
  $region5: #{basic_block_forward.7} parent=0 // pred_fallthru
    _
  // Predicated region
  $region6: #{basic_block_forward.7} parent=0 // pred_check
    _
  $region7: #{basic_block_forward.7} parent=0 // pred_check_branch
    %12 = sbr.rel (0) target = $region9
  $region8: #{basic_block_forward.7} parent=0 // pred_region
    _
  $region9: #{basic_block_forward.7} parent=0 // pred_fallthru
    _
  // Predicated region
  $region10: #{basic_block_forward.7} parent=0 // pred_check
    _
  $region11: #{basic_block_forward.7} parent=0 // pred_check_branch
    %14 = sbr.rel (0) target = $region13
  $region12: #{basic_block_forward.7} parent=0 // pred_region
    _
  $region13: #{basic_block_forward.7} parent=0 // pred_fallthru
    _
  // Predicated region
  $region14: #{basic_block_forward.7} parent=0 // pred_check
    _
  $region15: #{basic_block_forward.7} parent=0 // pred_check_branch
    %16 = sbr.rel (0) target = $region17
  $region16: #{basic_block_forward.7} parent=0 // pred_region
    _
  $region17: #{basic_block_forward.7} parent=0 // pred_fallthru
    _
  %v17 = vld [vmem:[%s0] sm:$0xff]
  %v18 = vunpack.c.l.bf16 %v17
  %v19 = vunpack.c.h.bf16 %v17
  %v20 = vld [vmem:[%s3] sm:$0xff]
  %v21 = vunpack.c.l.bf16 %v20
  %v22 = vunpack.c.h.bf16 %v20
  %v23 = vld [vmem:[%s1] sm:$0xf]
  %25 = vset.pattern.permute.xlu0 0
  %26 = vperm.xlu0 %25, %v23
  %v27 = vpop.permute.xlu0 %26
  %v29 = vunpack.c.l.s4 839922192
  %v30 = vunpack.c.0.s8 %v29
  %v31 = vlaneseq
  %v32 = vshrl.u32 %v31, 7
  %v33 = vsub.s32 %v30, %v32
  %v34 = vrot.slane %v27, %v33
  %v36 = vmul.f32 %v18, %v34
  %v37 = vmul.f32 %v19, %v34
  %v38 = vld [vmem:[%s2] sm:$0xf]
  %40 = vset.pattern.permute.xlu0 0
  %41 = vperm.xlu0 %40, %v38
  %v42 = vpop.permute.xlu0 %41
  %v44 = vunpack.c.l.s4 839922192
  %v45 = vunpack.c.0.s8 %v44
  %v46 = vlaneseq
  %v47 = vshrl.u32 %v46, 7
  %v48 = vsub.s32 %v45, %v47
  %v49 = vrot.slane %v42, %v48
  %v51 = vadd.f32 %v36, %v49
  %v52 = vadd.f32 %v37, %v49
  %v53 = vadd.f32 %v51, %v21
  %v54 = vadd.f32 %v52, %v22
  %v55 = vmax.f32 %v53, 0.0
  %v56 = vmax.f32 %v54, 0.0
  %57 = vst [vmem:[%s4] sm:$0xff] %v55
  %58 = vst [vmem:[%s4 + $0x8] sm:$0xff] %v56
  // Predicated region
  $region18: #{basic_block_forward.7} parent=0 // pred_check
    _
  $region19: #{basic_block_forward.7} parent=0 // pred_check_branch
    %60 = sbr.rel (0) target = $region21
  $region20: #{basic_block_forward.7} parent=0 // pred_region
    _
  $region21: #{basic_block_forward.7} parent=0 // pred_fallthru
    _
  // Predicated region
  $region22: #{basic_block_forward.7} parent=0 // pred_check
    _
  $region23: #{basic_block_forward.7} parent=0 // pred_check_branch
    %62 = sbr.rel (0) target = $region25
  $region24: #{basic_block_forward.7} parent=0 // pred_region
    _
  $region25: #{basic_block_forward.7} parent=0 // pred_fallthru
    _

</llo_original>
